<compile_context>
chip_gen: v7x
topology: tpu7x:2x2x1
jax: 0.10.0
libtpu: 0.0.40
codegen_flags: <defaults>
</compile_context>

<pallas_src>
import jax
import jax.numpy as jnp
from jax.experimental import pallas as pl
from jax.experimental.pallas import tpu as pltpu


def hh_kernel(s_ref, p_ref, ic_ref, ydot_ref, jvv_ref, jdiag_ref):
    # s_ref:  (1, 4, N)  de-interleaved state of one batch element [V; m; h; n]
    # p_ref:  (14, N)    per-neuron parameters
    # ic_ref: (1, 1, 1)  injected current for this batch element
    S = s_ref[0]                      # (4, N)
    V = S[0:1]                        # (1, N)
    m = S[1:2]
    h = S[2:3]
    n = S[3:4]
    P = p_ref[...]                    # (14, N)
    ic = ic_ref[0]                    # (1, 1)

    C     = P[0:1]
    g_Na  = P[1:2]
    E_Na  = P[2:3]
    g_K   = P[3:4]
    E_K   = P[4:5]
    g_L   = P[5:6]
    E_L   = P[6:7]
    m_inf = P[7:8]
    tau_m = P[8:9]
    h_inf = P[9:10]
    tau_h = P[10:11]
    n_inf = P[11:12]
    tau_n = P[12:13]
    g_C   = P[13:14]

    # Parameter-derived quantities, all at (1, N).
    invC = 1.0 / C
    inv_tau_m = 1.0 / tau_m
    inv_tau_h = 1.0 / tau_h
    inv_tau_n = 1.0 / tau_n
    gc_c = g_C * invC                                   # (1, N) : g_C[j]/C[j]
    s_gc = jnp.sum(gc_c, axis=-1, keepdims=True)        # (1, 1) : sum_j g_C[j]/C[j]

    m2 = m * m
    m3 = m2 * m
    n2 = n * n
    n3 = n2 * n
    n4 = n2 * n2

    # Membrane equation.
    i_na = g_Na * (m3 * h) * (V - E_Na)
    i_k  = g_K * n4 * (V - E_K)
    i_l  = g_L * (V - E_L)
    dVdt = invC * (ic - i_na - i_k - i_l)

    # Coupling, O(N): sum_j gc_c[j]*(V_i - V_j) = V_i*s_gc - sum_j gc_c[j]*V_j
    dV = V * s_gc - jnp.sum(gc_c * V, axis=-1, keepdims=True)

    ydot_ref[0] = jnp.concatenate(
        [dVdt + dV,
         (m_inf - m) * inv_tau_m,
         (h_inf - h) * inv_tau_h,
         (n_inf - n) * inv_tau_n], axis=0)              # (4, N)

    # V-V Jacobian block (dense over neurons because of the coupling).
    # jvv[i, k] = eye*(diag_vals + s_gc) - gc_c[k]; on the diagonal i==k so the
    # diagonal term can be indexed by the lane (column) axis -> single select.
    N_ = V.shape[-1]
    r = jax.lax.broadcasted_iota(jnp.int32, (N_, N_), 0)
    c = jax.lax.broadcasted_iota(jnp.int32, (N_, N_), 1)
    diag_vals = invC * (-g_L - g_Na * h * m3 - g_K * n4)        # (1, N)
    diag_term = diag_vals + s_gc - gc_c                          # (1, N)
    jvv_ref[0] = jnp.where(r == c, diag_term, -gc_c)             # (N, N)

    # dV/dm, dV/dh, dV/dn diagonal values (embedded on the diagonal by wrapper).
    vmENa = V - E_Na
    jdm = -invC * (3.0 * g_Na * h * m2 * vmENa)
    jdh = -invC * (g_Na * m3 * vmENa)
    jdn = -invC * (4.0 * g_K * n3 * (V - E_K))
    jdiag_ref[0] = jnp.concatenate([jdm, jdh, jdn], axis=0)      # (3, N)


def hh_forward(t, y, params, I_fn):
    """params: (14, N) packed as
    [C, g_Na, E_Na, g_K, E_K, g_L, E_L, m_inf, tau_m, h_inf, tau_h, n_inf, tau_n, g_C].
    Returns (ydot: (B, 4N), J: (B, 4N, 4N)) matching the PyTorch module."""
    B = y.shape[0]
    N = params.shape[1]
    assert y.shape[-1] == 4 * N

    Ic = I_fn(t).astype(jnp.float32).reshape(B, 1, 1)
    # De-interleave the state once: (B, 4N) -> (B, 4, N) with neurons on lanes.
    state = jnp.transpose(y.reshape(B, N, 4), (0, 2, 1)).astype(jnp.float32)

    grid_spec = pltpu.PrefetchScalarGridSpec(
        num_scalar_prefetch=0,
        grid=(B,),
        in_specs=[
            pl.BlockSpec((1, 4, N), lambda b: (b, 0, 0)),     # state
            pl.BlockSpec((14, N), lambda b: (0, 0)),          # params (shared)
            pl.BlockSpec((1, 1, 1), lambda b: (b, 0, 0)),     # injected current
        ],
        out_specs=[
            pl.BlockSpec((1, 4, N), lambda b: (b, 0, 0)),     # ydot components
            pl.BlockSpec((1, N, N), lambda b: (b, 0, 0)),     # V-V Jacobian block
            pl.BlockSpec((1, 3, N), lambda b: (b, 0, 0)),     # dV/d{m,h,n} diag values
        ],
    )
    out_shapes = (
        jax.ShapeDtypeStruct((B, 4, N), jnp.float32),
        jax.ShapeDtypeStruct((B, N, N), jnp.float32),
        jax.ShapeDtypeStruct((B, 3, N), jnp.float32),
    )
    ydot_k, jvv, jdiag = pl.pallas_call(
        hh_kernel,
        out_shape=out_shapes,
        grid_spec=grid_spec,
        compiler_params=pltpu.CompilerParams(
            dimension_semantics=("parallel",)),
    )(state, params.astype(jnp.float32), Ic)

    # Interleave ydot components back to the module's layout (B, 4N).
    ydot = jnp.transpose(ydot_k, (0, 2, 1)).reshape(B, 4 * N)

    # Gate self-relaxation diagonals are pure parameter math: -1/tau_{m,h,n}.
    ntau = -1.0 / jnp.stack([params[8], params[10], params[12]]).astype(jnp.float32)  # (3, N)

    # Single block-layout build + one reshape:
    # Jfull[b, i, r, j, c] = dF_{4i+r}/dy_{4j+c}.
    eye = jnp.eye(N, dtype=jnp.float32)
    emb = lambda v: eye[None] * v[:, :, None]                        # (B, N, N)
    gdiag = lambda row: jnp.broadcast_to(jnp.diag(row), (B, N, N))   # (B, N, N)
    zero = jnp.zeros((B, N, N), jnp.float32)
    row0 = jnp.stack([jvv, emb(jdiag[:, 0]), emb(jdiag[:, 1]), emb(jdiag[:, 2])], axis=-1)
    row1 = jnp.stack([zero, gdiag(ntau[0]), zero, zero], axis=-1)
    row2 = jnp.stack([zero, zero, gdiag(ntau[1]), zero], axis=-1)
    row3 = jnp.stack([zero, zero, zero, gdiag(ntau[2])], axis=-1)
    J = jnp.stack([row0, row1, row2, row3], axis=2).reshape(B, 4 * N, 4 * N)
    return ydot, J


def hh_forward_ref(t, y, params, I_fn):
    """Pure-JAX reference mirroring the PyTorch forward (for validation)."""
    B = y.shape[0]
    N = params.shape[1]
    (C, g_Na, E_Na, g_K, E_K, g_L, E_L,
     m_inf, tau_m, h_inf, tau_h, n_inf, tau_n, g_C) = [params[i] for i in range(14)]
    Ic = I_fn(t).astype(jnp.float32)
    V = y[..., 0::4]; m = y[..., 1::4]; h = y[..., 2::4]; n = y[..., 3::4]
    ydot = jnp.zeros_like(y)
    dVdt = 1.0 / C[None] * (-g_Na[None] * m**3.0 * h * (V - E_Na[None])
                            - g_K[None] * n**4.0 * (V - E_K[None])
                            - g_L[None] * (V - E_L[None]) + Ic[..., None])
    dV = jnp.sum(g_C[None] * (V[..., :, None] - V[..., None, :]) / C[None], axis=-1)
    ydot = ydot.at[..., 0::4].set(dVdt + dV)
    ydot = ydot.at[..., 1::4].set((m_inf - m) / tau_m)
    ydot = ydot.at[..., 2::4].set((h_inf - h) / tau_h)
    ydot = ydot.at[..., 3::4].set((n_inf - n) / tau_n)
    J = jnp.zeros(y.shape + (y.shape[-1],), jnp.float32)
    de = lambda a: jnp.eye(N)[None] * a[..., None]
    blk = de(1.0 / C[None] * (-g_L[None] - g_Na[None] * h * m**3.0 - g_K[None] * n**4.0))
    blk = blk - (g_C / C)[None, None, :]
    blk = blk + jnp.eye(N)[None] * jnp.sum(g_C / C)
    J = J.at[..., 0::4, 0::4].set(blk)
    J = J.at[..., 0::4, 1::4].set(de(-1.0 / C[None] * (3.0 * g_Na[None] * h * m**2.0 * (-E_Na[None] + V))))
    J = J.at[..., 0::4, 2::4].set(de(-1.0 / C[None] * (g_Na[None] * m**3.0 * (-E_Na[None] + V))))
    J = J.at[..., 0::4, 3::4].set(de(-1.0 / C[None] * (4.0 * g_K[None] * n**3.0 * (-E_K[None] + V))))
    J = J.at[..., 1::4, 1::4].set(jnp.broadcast_to(jnp.diag(-1.0 / tau_m), (B, N, N)))
    J = J.at[..., 2::4, 2::4].set(jnp.broadcast_to(jnp.diag(-1.0 / tau_h), (B, N, N)))
    J = J.at[..., 3::4, 3::4].set(jnp.broadcast_to(jnp.diag(-1.0 / tau_n), (B, N, N)))
    return ydot, J


if __name__ == "__main__":
    B = 2          # batch of states
    N = 4          # n_neurons  -> n_equations = 16

    # Deterministic, physiologically-plausible per-neuron parameters.
    k = jnp.arange(N, dtype=jnp.float32)
    C     = 1.0 + 0.1 * k
    g_Na  = 120.0 + 1.0 * k
    E_Na  = jnp.full((N,), 50.0)
    g_K   = 36.0 + 0.5 * k
    E_K   = jnp.full((N,), -77.0)
    g_L   = jnp.full((N,), 0.3)
    E_L   = jnp.full((N,), -54.4)
    m_inf = 0.05 + 0.01 * k
    tau_m = 0.5 + 0.05 * k
    h_inf = 0.60 - 0.02 * k
    tau_h = 1.0 + 0.1 * k
    n_inf = 0.32 + 0.01 * k
    tau_n = 2.0 + 0.2 * k
    g_C   = 0.1 + 0.02 * k
    params = jnp.stack([C, g_Na, E_Na, g_K, E_K, g_L, E_L,
                        m_inf, tau_m, h_inf, tau_h, n_inf, tau_n, g_C]
                       ).astype(jnp.float32)          # (14, N)

    # Injected current as a function of time (per batch element).
    I_amp = jnp.array([10.0, 6.0], dtype=jnp.float32)
    I_fn = lambda t: I_amp * (1.0 + jnp.cos(t))

    # Deterministic state: V in mV range, gates in [0, 1].
    key = jax.random.PRNGKey(0)
    kv, kg = jax.random.split(key)
    V0 = jax.random.uniform(kv, (B, N), jnp.float32, -80.0, 40.0)
    gates0 = jax.random.uniform(kg, (B, N, 3), jnp.float32, 0.05, 0.95)
    y = jnp.concatenate([V0[..., None], gates0], axis=-1).reshape(B, 4 * N)

    t = jnp.float32(0.25)

    ydot, J = hh_forward(t, y, params, I_fn)
    jax.block_until_ready((ydot, J))

    ydot_r, J_r = hh_forward_ref(t, y, params, I_fn)
    assert ydot.shape == (B, 4 * N) and J.shape == (B, 4 * N, 4 * N)
    assert jnp.allclose(ydot, ydot_r, rtol=1e-5, atol=1e-4)
    assert jnp.allclose(J, J_r, rtol=1e-5, atol=1e-4)

    print("KERNEL_OK")
</pallas_src>

<mosaic_0001>
module attributes {stable_mosaic.version = 11 : i64} {
  func.func @hh_kernel(%arg0: i32, %arg1: memref<1x4x4xf32, #tpu.memory_space<vmem>>, %arg2: memref<14x4xf32, #tpu.memory_space<vmem>>, %arg3: memref<1x1x1xf32, #tpu.memory_space<vmem>>, %arg4: memref<1x4x4xf32, #tpu.memory_space<vmem>>, %arg5: memref<1x4x4xf32, #tpu.memory_space<vmem>>, %arg6: memref<1x3x4xf32, #tpu.memory_space<vmem>>) attributes {dimension_semantics = [#tpu.dimension_semantics<parallel>], iteration_bounds = array<i64: 2>, scalar_prefetch = 0 : i64, scratch_operands = 0 : i64, tpu.core_type = #tpu.core_type<tc>, window_params = [{transform_indices = @transform_0, window_bounds = array<i64: 1, 4, 4>}, {pipeline_mode = #tpu.pipeline_mode<synchronous>, transform_indices = @transform_1, window_bounds = array<i64: 14, 4>}, {transform_indices = @transform_2, window_bounds = array<i64: 1, 1, 1>}, {transform_indices = @transform_3, window_bounds = array<i64: 1, 4, 4>}, {transform_indices = @transform_4, window_bounds = array<i64: 1, 4, 4>}, {transform_indices = @transform_5, window_bounds = array<i64: 1, 3, 4>}]} {
    %c0 = arith.constant 0 : index
    %c0_0 = arith.constant 0 : index
    %c0_1 = arith.constant 0 : index
    %0 = vector.load %arg1[%c0, %c0_0, %c0_1] : memref<1x4x4xf32, #tpu.memory_space<vmem>>, vector<1x4x4xf32>
    %1 = vector.shape_cast %0 : vector<1x4x4xf32> to vector<4x4xf32>
    %2 = vector.extract_strided_slice %1 {offsets = [0, 0], sizes = [1, 4], strides = [1, 1]} : vector<4x4xf32> to vector<1x4xf32>
    %3 = vector.extract_strided_slice %1 {offsets = [1, 0], sizes = [1, 4], strides = [1, 1]} : vector<4x4xf32> to vector<1x4xf32>
    %4 = vector.extract_strided_slice %1 {offsets = [2, 0], sizes = [1, 4], strides = [1, 1]} : vector<4x4xf32> to vector<1x4xf32>
    %5 = vector.extract_strided_slice %1 {offsets = [3, 0], sizes = [1, 4], strides = [1, 1]} : vector<4x4xf32> to vector<1x4xf32>
    %c0_2 = arith.constant 0 : index
    %c0_3 = arith.constant 0 : index
    %6 = vector.load %arg2[%c0_2, %c0_3] : memref<14x4xf32, #tpu.memory_space<vmem>>, vector<14x4xf32>
    %c0_4 = arith.constant 0 : index
    %c0_5 = arith.constant 0 : index
    %c0_6 = arith.constant 0 : index
    %7 = vector.load %arg3[%c0_4, %c0_5, %c0_6] : memref<1x1x1xf32, #tpu.memory_space<vmem>>, vector<1x1x1xf32>
    %8 = vector.shape_cast %7 : vector<1x1x1xf32> to vector<1x1xf32>
    %9 = vector.extract_strided_slice %6 {offsets = [0, 0], sizes = [1, 4], strides = [1, 1]} : vector<14x4xf32> to vector<1x4xf32>
    %10 = vector.extract_strided_slice %6 {offsets = [1, 0], sizes = [1, 4], strides = [1, 1]} : vector<14x4xf32> to vector<1x4xf32>
    %11 = vector.extract_strided_slice %6 {offsets = [2, 0], sizes = [1, 4], strides = [1, 1]} : vector<14x4xf32> to vector<1x4xf32>
    %12 = vector.extract_strided_slice %6 {offsets = [3, 0], sizes = [1, 4], strides = [1, 1]} : vector<14x4xf32> to vector<1x4xf32>
    %13 = vector.extract_strided_slice %6 {offsets = [4, 0], sizes = [1, 4], strides = [1, 1]} : vector<14x4xf32> to vector<1x4xf32>
    %14 = vector.extract_strided_slice %6 {offsets = [5, 0], sizes = [1, 4], strides = [1, 1]} : vector<14x4xf32> to vector<1x4xf32>
    %15 = vector.extract_strided_slice %6 {offsets = [6, 0], sizes = [1, 4], strides = [1, 1]} : vector<14x4xf32> to vector<1x4xf32>
    %16 = vector.extract_strided_slice %6 {offsets = [7, 0], sizes = [1, 4], strides = [1, 1]} : vector<14x4xf32> to vector<1x4xf32>
    %17 = vector.extract_strided_slice %6 {offsets = [8, 0], sizes = [1, 4], strides = [1, 1]} : vector<14x4xf32> to vector<1x4xf32>
    %18 = vector.extract_strided_slice %6 {offsets = [9, 0], sizes = [1, 4], strides = [1, 1]} : vector<14x4xf32> to vector<1x4xf32>
    %19 = vector.extract_strided_slice %6 {offsets = [10, 0], sizes = [1, 4], strides = [1, 1]} : vector<14x4xf32> to vector<1x4xf32>
    %20 = vector.extract_strided_slice %6 {offsets = [11, 0], sizes = [1, 4], strides = [1, 1]} : vector<14x4xf32> to vector<1x4xf32>
    %21 = vector.extract_strided_slice %6 {offsets = [12, 0], sizes = [1, 4], strides = [1, 1]} : vector<14x4xf32> to vector<1x4xf32>
    %22 = vector.extract_strided_slice %6 {offsets = [13, 0], sizes = [1, 4], strides = [1, 1]} : vector<14x4xf32> to vector<1x4xf32>
    %cst = arith.constant 1.000000e+00 : f32
    %23 = vector.broadcast %cst : f32 to vector<1x4xf32>
    %24 = arith.divf %23, %9 : vector<1x4xf32>
    %cst_7 = arith.constant 1.000000e+00 : f32
    %25 = vector.broadcast %cst_7 : f32 to vector<1x4xf32>
    %26 = arith.divf %25, %17 : vector<1x4xf32>
    %cst_8 = arith.constant 1.000000e+00 : f32
    %27 = vector.broadcast %cst_8 : f32 to vector<1x4xf32>
    %28 = arith.divf %27, %19 : vector<1x4xf32>
    %cst_9 = arith.constant 1.000000e+00 : f32
    %29 = vector.broadcast %cst_9 : f32 to vector<1x4xf32>
    %30 = arith.divf %29, %21 : vector<1x4xf32>
    %31 = arith.mulf %22, %24 : vector<1x4xf32>
    %cst_10 = arith.constant dense<0.000000e+00> : vector<1xf32>
    %32 = vector.multi_reduction <add>, %31, %cst_10 [1] : vector<1x4xf32> to vector<1xf32>
    %33 = vector.shape_cast %32 : vector<1xf32> to vector<1x1xf32>
    %34 = arith.mulf %3, %3 : vector<1x4xf32>
    %35 = arith.mulf %34, %3 : vector<1x4xf32>
    %36 = arith.mulf %5, %5 : vector<1x4xf32>
    %37 = arith.mulf %36, %5 : vector<1x4xf32>
    %38 = arith.mulf %36, %36 : vector<1x4xf32>
    %39 = arith.mulf %35, %4 : vector<1x4xf32>
    %40 = arith.mulf %10, %39 : vector<1x4xf32>
    %41 = arith.subf %2, %11 : vector<1x4xf32>
    %42 = arith.mulf %40, %41 : vector<1x4xf32>
    %43 = arith.mulf %12, %38 : vector<1x4xf32>
    %44 = arith.subf %2, %13 : vector<1x4xf32>
    %45 = arith.mulf %43, %44 : vector<1x4xf32>
    %46 = arith.subf %2, %15 : vector<1x4xf32>
    %47 = arith.mulf %14, %46 : vector<1x4xf32>
    %48 = vector.broadcast %8 : vector<1x1xf32> to vector<1x4xf32>
    %49 = arith.subf %48, %42 : vector<1x4xf32>
    %50 = arith.subf %49, %45 : vector<1x4xf32>
    %51 = arith.subf %50, %47 : vector<1x4xf32>
    %52 = arith.mulf %24, %51 : vector<1x4xf32>
    %53 = vector.broadcast %33 : vector<1x1xf32> to vector<1x4xf32>
    %54 = arith.mulf %2, %53 : vector<1x4xf32>
    %55 = arith.mulf %31, %2 : vector<1x4xf32>
    %cst_11 = arith.constant dense<0.000000e+00> : vector<1xf32>
    %56 = vector.multi_reduction <add>, %55, %cst_11 [1] : vector<1x4xf32> to vector<1xf32>
    %57 = vector.shape_cast %56 : vector<1xf32> to vector<1x1xf32>
    %58 = vector.broadcast %57 : vector<1x1xf32> to vector<1x4xf32>
    %59 = arith.subf %54, %58 : vector<1x4xf32>
    %60 = arith.addf %52, %59 : vector<1x4xf32>
    %61 = arith.subf %16, %3 : vector<1x4xf32>
    %62 = arith.mulf %61, %26 : vector<1x4xf32>
    %63 = arith.subf %18, %4 : vector<1x4xf32>
    %64 = arith.mulf %63, %28 : vector<1x4xf32>
    %65 = arith.subf %20, %5 : vector<1x4xf32>
    %66 = arith.mulf %65, %30 : vector<1x4xf32>
    %67 = tpu.concatenate %60, %62, %64, %66 in 0 : vector<1x4xf32>, vector<1x4xf32>, vector<1x4xf32>, vector<1x4xf32> -> vector<4x4xf32>
    %c0_12 = arith.constant 0 : index
    %c0_13 = arith.constant 0 : index
    %c0_14 = arith.constant 0 : index
    %68 = vector.load %arg4[%c0_12, %c0_13, %c0_14] : memref<1x4x4xf32, #tpu.memory_space<vmem>>, vector<1x4x4xf32>
    %69 = vector.shape_cast %68 : vector<1x4x4xf32> to vector<4x4xf32>
    %70 = vector.shape_cast %67 : vector<4x4xf32> to vector<1x4x4xf32>
    tpu.vector_store %arg4[%c0_12, %c0_13, %c0_14], %70 {strides = array<i32>} : memref<1x4x4xf32, #tpu.memory_space<vmem>>, vector<1x4x4xf32>,
    %71 = tpu.iota {dimensions = array<i32: 0>} : vector<4x4xi32>
    %72 = tpu.iota {dimensions = array<i32: 1>} : vector<4x4xi32>
    %cst_15 = arith.constant 0.000000e+00 : f32
    %73 = vector.broadcast %cst_15 : f32 to vector<1x4xf32>
    %74 = arith.subf %73, %14 : vector<1x4xf32>
    %75 = arith.mulf %10, %4 : vector<1x4xf32>
    %76 = arith.mulf %75, %35 : vector<1x4xf32>
    %77 = arith.subf %74, %76 : vector<1x4xf32>
    %78 = arith.mulf %12, %38 : vector<1x4xf32>
    %79 = arith.subf %77, %78 : vector<1x4xf32>
    %80 = arith.mulf %24, %79 : vector<1x4xf32>
    %81 = vector.broadcast %33 : vector<1x1xf32> to vector<1x4xf32>
    %82 = arith.addf %80, %81 : vector<1x4xf32>
    %83 = arith.subf %82, %31 : vector<1x4xf32>
    %84 = arith.cmpi eq, %71, %72 : vector<4x4xi32>
    %cst_16 = arith.constant 0.000000e+00 : f32
    %85 = vector.broadcast %cst_16 : f32 to vector<1x4xf32>
    %86 = arith.subf %85, %31 : vector<1x4xf32>
    %87 = vector.shape_cast %83 : vector<1x4xf32> to vector<1x4xf32>
    %88 = vector.broadcast %87 : vector<1x4xf32> to vector<4x4xf32>
    %89 = vector.shape_cast %86 : vector<1x4xf32> to vector<1x4xf32>
    %90 = vector.broadcast %89 : vector<1x4xf32> to vector<4x4xf32>
    %91 = arith.select %84, %88, %90 : vector<4x4xi1>, vector<4x4xf32>
    %c0_17 = arith.constant 0 : index
    %c0_18 = arith.constant 0 : index
    %c0_19 = arith.constant 0 : index
    %92 = vector.load %arg5[%c0_17, %c0_18, %c0_19] : memref<1x4x4xf32, #tpu.memory_space<vmem>>, vector<1x4x4xf32>
    %93 = vector.shape_cast %92 : vector<1x4x4xf32> to vector<4x4xf32>
    %94 = vector.shape_cast %91 : vector<4x4xf32> to vector<1x4x4xf32>
    tpu.vector_store %arg5[%c0_17, %c0_18, %c0_19], %94 {strides = array<i32>} : memref<1x4x4xf32, #tpu.memory_space<vmem>>, vector<1x4x4xf32>,
    %95 = arith.subf %2, %11 : vector<1x4xf32>
    %cst_20 = arith.constant 0.000000e+00 : f32
    %96 = vector.broadcast %cst_20 : f32 to vector<1x4xf32>
    %97 = arith.subf %96, %24 : vector<1x4xf32>
    %cst_21 = arith.constant 3.000000e+00 : f32
    %98 = vector.broadcast %cst_21 : f32 to vector<1x4xf32>
    %99 = arith.mulf %98, %10 : vector<1x4xf32>
    %100 = arith.mulf %99, %4 : vector<1x4xf32>
    %101 = arith.mulf %100, %34 : vector<1x4xf32>
    %102 = arith.mulf %101, %95 : vector<1x4xf32>
    %103 = arith.mulf %97, %102 : vector<1x4xf32>
    %cst_22 = arith.constant 0.000000e+00 : f32
    %104 = vector.broadcast %cst_22 : f32 to vector<1x4xf32>
    %105 = arith.subf %104, %24 : vector<1x4xf32>
    %106 = arith.mulf %10, %35 : vector<1x4xf32>
    %107 = arith.mulf %106, %95 : vector<1x4xf32>
    %108 = arith.mulf %105, %107 : vector<1x4xf32>
    %cst_23 = arith.constant 0.000000e+00 : f32
    %109 = vector.broadcast %cst_23 : f32 to vector<1x4xf32>
    %110 = arith.subf %109, %24 : vector<1x4xf32>
    %cst_24 = arith.constant 4.000000e+00 : f32
    %111 = vector.broadcast %cst_24 : f32 to vector<1x4xf32>
    %112 = arith.mulf %111, %12 : vector<1x4xf32>
    %113 = arith.mulf %112, %37 : vector<1x4xf32>
    %114 = arith.subf %2, %13 : vector<1x4xf32>
    %115 = arith.mulf %113, %114 : vector<1x4xf32>
    %116 = arith.mulf %110, %115 : vector<1x4xf32>
    %117 = tpu.concatenate %103, %108, %116 in 0 : vector<1x4xf32>, vector<1x4xf32>, vector<1x4xf32> -> vector<3x4xf32>
    %c0_25 = arith.constant 0 : index
    %c0_26 = arith.constant 0 : index
    %c0_27 = arith.constant 0 : index
    %118 = vector.load %arg6[%c0_25, %c0_26, %c0_27] : memref<1x3x4xf32, #tpu.memory_space<vmem>>, vector<1x3x4xf32>
    %119 = vector.shape_cast %118 : vector<1x3x4xf32> to vector<3x4xf32>
    %120 = vector.shape_cast %117 : vector<3x4xf32> to vector<1x3x4xf32>
    tpu.vector_store %arg6[%c0_25, %c0_26, %c0_27], %120 {strides = array<i32>} : memref<1x3x4xf32, #tpu.memory_space<vmem>>, vector<1x3x4xf32>,
    return
  }
  func.func @transform_0(%arg0: i32) -> (i32, i32, i32) {
    %c0_i32 = arith.constant 0 : i32
    %c0_i32_0 = arith.constant 0 : i32
    %c0_i32_1 = arith.constant 0 : i32
    return %arg0, %c0_i32, %c0_i32_0 : i32, i32, i32
  }
  func.func @transform_1(%arg0: i32) -> (i32, i32) {
    %c0_i32 = arith.constant 0 : i32
    %c0_i32_0 = arith.constant 0 : i32
    %c0_i32_1 = arith.constant 0 : i32
    return %c0_i32, %c0_i32_0 : i32, i32
  }
  func.func @transform_2(%arg0: i32) -> (i32, i32, i32) {
    %c0_i32 = arith.constant 0 : i32
    %c0_i32_0 = arith.constant 0 : i32
    %c0_i32_1 = arith.constant 0 : i32
    return %arg0, %c0_i32, %c0_i32_0 : i32, i32, i32
  }
  func.func @transform_3(%arg0: i32) -> (i32, i32, i32) {
    %c0_i32 = arith.constant 0 : i32
    %c0_i32_0 = arith.constant 0 : i32
    %c0_i32_1 = arith.constant 0 : i32
    return %arg0, %c0_i32, %c0_i32_0 : i32, i32, i32
  }
  func.func @transform_4(%arg0: i32) -> (i32, i32, i32) {
    %c0_i32 = arith.constant 0 : i32
    %c0_i32_0 = arith.constant 0 : i32
    %c0_i32_1 = arith.constant 0 : i32
    return %arg0, %c0_i32, %c0_i32_0 : i32, i32, i32
  }
  func.func @transform_5(%arg0: i32) -> (i32, i32, i32) {
    %c0_i32 = arith.constant 0 : i32
    %c0_i32_0 = arith.constant 0 : i32
    %c0_i32_1 = arith.constant 0 : i32
    return %arg0, %c0_i32, %c0_i32_0 : i32, i32, i32
  }
}

</mosaic_0001>

<llo_original>
// kernel: tpu_custom_call.1
$region0: #{tpu_custom_call.1}
  #allocation0 [shape = 'u32[]', space=smem, size = 0x4, offset = 0x4, fixed_abs, tag = 'smem constant byte address 0x4 - core index']
  #allocation1 [shape = 'u32[144,128]{1,0:T(1,128)}', space=vmem, size = 0x12000, scoped, tag = 'internal scratch']
  %s0 = inlined_call_operand.vmem [shape: f32[2,4,4], index: 0, kind: input, shape index: {}]
  %s1 = inlined_call_operand.vmem [shape: f32[14,4], index: 1, kind: input, shape index: {}]
  %s2 = inlined_call_operand.vmem [shape: f32[2,1,1], index: 2, kind: input, shape index: {}]
  %s3 = inlined_call_operand.hbm [shape: f32[2,4,4], index: 3, kind: output, shape index: {0}]
  %s4 = inlined_call_operand.hbm [shape: f32[2,4,4], index: 4, kind: output, shape index: {1}]
  %s5 = inlined_call_operand.vmem [shape: f32[2,3,4], index: 5, kind: output, shape index: {2}]
  %6 = xla_tuple %s3, %s4, %s5
  %s7 = sld [smem:[#allocation0]]
  $region61: #{tpu_custom_call.1} parent=0
    _
  %s9 = ssub.s32 1, %s7
  %s10 = scalar_select 0, %s9, %s7
  $region1: #{tpu_custom_call.1} parent=0
    #allocation2 [shape = 'u8[4096]{0}', space=vmem, size = 0x1000, scoped, tag = 'output window, operand 0']
    #allocation3 [shape = 's32[2]{0}', space=sflag, size = 0x8, scoped, tag = 'scoped memory for tpu_custom_call.1']
    #allocation4 [shape = 'u8[4096]{0}', space=vmem, size = 0x1000, scoped, tag = 'output window, operand 1']
    #allocation5 [shape = 's32[2]{0}', space=sflag, size = 0x8, scoped, tag = 'scoped memory for tpu_custom_call.1']
    %11 = vsyncpa [#allocation3], 0
    %s12 = scalar_lea.sflag [#allocation3], 1
    %13 = vsyncpa %s12, 0
    %14 = vsyncpa [#allocation5], 0
    %s15 = scalar_lea.sflag [#allocation5], 1
    %16 = vsyncpa %s15, 0
    loop: start=0, step=1, limit=4
    $region2: #{tpu_custom_call.1} parent=1 // loop_pre_header
      _
    $region3: #{tpu_custom_call.1} parent=1 // loop_header
      %s18 = sphi 0, %s22
      %p19 = scmp.ge.s32.totalorder %s18, 4
      %s28 = sphi 0, %s30
      %s31 = sphi 0, %s28
      %s32 = sphi 0, %s31
      %s48 = sphi 0, %s32
      %s52 = sphi 0, %s52
      %s54 = sphi 0, %s52
      %s55 = sphi 0, %s54
      %s69 = sphi 0, %s55
      %s75 = sphi 0, %s77
      %s78 = sphi 0, %s75
      %s79 = sphi 0, %s78
      %s95 = sphi 0, %s79
      %s101 = sphi 0, %s103
      %s104 = sphi 0, %s101
      %s105 = sphi 0, %s104
      %s121 = sphi 0, %s105
      %s127 = sphi 0, %s129
      %s130 = sphi 0, %s127
      %s131 = sphi 0, %s130
      %s147 = sphi 0, %s131
      %s153 = sphi 0, %s155
      %s156 = sphi 0, %s153
      %s157 = sphi 0, %s156
      %s173 = sphi 0, %s157
    $region4: #{tpu_custom_call.1} parent=1 // loop_header_branch
      %21 = sbr.rel (%p19) target = $region8
    $region5: #{tpu_custom_call.1} parent=1 // loop_body
      %s23 = ssub.s32 %s18, 1
      %s24 = ssub.s32 %s18, 2
      %s25 = sadd.s32 %s18, 1
      %s26 = ssub.s32 %s18, %s25
      %p27 = scmp.eq.s32.totalorder %s26, 0
      %s29 = sadd.s32 %s28, 1
      %s30 = scalar_select %p27, %s28, %s29
      %p33 = pneg %p27
      %p34 = scmp.eq.s32.totalorder %s18, 1
      %p35 = por %p33, %p34
      %p36 = scmp.ne.s32.totalorder %s28, %s31
      %p37 = scmp.eq.s32.totalorder %s18, 0
      %p38 = por %p36, %p37
      %p39 = scmp.ne.s32.totalorder %s28, %s31
      %p40 = scmp.eq.s32.totalorder %s23, 1
      %p41 = por %p39, %p40
      %p42 = scmp.ne.s32.totalorder %s31, %s32
      %p43 = scmp.eq.s32.totalorder %s23, 0
      %p44 = por %p42, %p43
      %p45 = scmp.ne.s32.totalorder %s31, %s32
      %p46 = scmp.eq.s32.totalorder %s24, 1
      %p47 = por %p45, %p46
      %p49 = scmp.ne.s32.totalorder %s32, %s48
      %p50 = scmp.eq.s32.totalorder %s24, 0
      %p51 = por %p49, %p50
      %s53 = sadd.s32 %s52, 1
      %p56 = scmp.eq.s32.totalorder %s18, 1
      %p57 = scmp.ne.s32.totalorder %s52, %s54
      %p58 = scmp.eq.s32.totalorder %s18, 0
      %p59 = por %p57, %p58
      %p60 = scmp.ne.s32.totalorder %s52, %s54
      %p61 = scmp.eq.s32.totalorder %s23, 1
      %p62 = por %p60, %p61
      %p63 = scmp.ne.s32.totalorder %s54, %s55
      %p64 = scmp.eq.s32.totalorder %s23, 0
      %p65 = por %p63, %p64
      %p66 = scmp.ne.s32.totalorder %s54, %s55
      %p67 = scmp.eq.s32.totalorder %s24, 1
      %p68 = por %p66, %p67
      %p70 = scmp.ne.s32.totalorder %s55, %s69
      %p71 = scmp.eq.s32.totalorder %s24, 0
      %p72 = por %p70, %p71
      %s73 = ssub.s32 %s18, %s25
      %p74 = scmp.eq.s32.totalorder %s73, 0
      %s76 = sadd.s32 %s75, 1
      %s77 = scalar_select %p74, %s75, %s76
      %p80 = pneg %p74
      %p81 = scmp.eq.s32.totalorder %s18, 1
      %p82 = por %p80, %p81
      %p83 = scmp.ne.s32.totalorder %s75, %s78
      %p84 = scmp.eq.s32.totalorder %s18, 0
      %p85 = por %p83, %p84
      %p86 = scmp.ne.s32.totalorder %s75, %s78
      %p87 = scmp.eq.s32.totalorder %s23, 1
      %p88 = por %p86, %p87
      %p89 = scmp.ne.s32.totalorder %s78, %s79
      %p90 = scmp.eq.s32.totalorder %s23, 0
      %p91 = por %p89, %p90
      %p92 = scmp.ne.s32.totalorder %s78, %s79
      %p93 = scmp.eq.s32.totalorder %s24, 1
      %p94 = por %p92, %p93
      %p96 = scmp.ne.s32.totalorder %s79, %s95
      %p97 = scmp.eq.s32.totalorder %s24, 0
      %p98 = por %p96, %p97
      %s99 = ssub.s32 %s18, %s25
      %p100 = scmp.eq.s32.totalorder %s99, 0
      %s102 = sadd.s32 %s101, 1
      %s103 = scalar_select %p100, %s101, %s102
      %p106 = pneg %p100
      %p107 = scmp.eq.s32.totalorder %s18, 1
      %p108 = por %p106, %p107
      %p109 = scmp.ne.s32.totalorder %s101, %s104
      %p110 = scmp.eq.s32.totalorder %s18, 0
      %p111 = por %p109, %p110
      %p112 = scmp.ne.s32.totalorder %s101, %s104
      %p113 = scmp.eq.s32.totalorder %s23, 1
      %p114 = por %p112, %p113
      %p115 = scmp.ne.s32.totalorder %s104, %s105
      %p116 = scmp.eq.s32.totalorder %s23, 0
      %p117 = por %p115, %p116
      %p118 = scmp.ne.s32.totalorder %s104, %s105
      %p119 = scmp.eq.s32.totalorder %s24, 1
      %p120 = por %p118, %p119
      %p122 = scmp.ne.s32.totalorder %s105, %s121
      %p123 = scmp.eq.s32.totalorder %s24, 0
      %p124 = por %p122, %p123
      %s125 = ssub.s32 %s18, %s25
      %p126 = scmp.eq.s32.totalorder %s125, 0
      %s128 = sadd.s32 %s127, 1
      %s129 = scalar_select %p126, %s127, %s128
      %p132 = pneg %p126
      %p133 = scmp.eq.s32.totalorder %s18, 1
      %p134 = por %p132, %p133
      %p135 = scmp.ne.s32.totalorder %s127, %s130
      %p136 = scmp.eq.s32.totalorder %s18, 0
      %p137 = por %p135, %p136
      %p138 = scmp.ne.s32.totalorder %s127, %s130
      %p139 = scmp.eq.s32.totalorder %s23, 1
      %p140 = por %p138, %p139
      %p141 = scmp.ne.s32.totalorder %s130, %s131
      %p142 = scmp.eq.s32.totalorder %s23, 0
      %p143 = por %p141, %p142
      %p144 = scmp.ne.s32.totalorder %s130, %s131
      %p145 = scmp.eq.s32.totalorder %s24, 1
      %p146 = por %p144, %p145
      %p148 = scmp.ne.s32.totalorder %s131, %s147
      %p149 = scmp.eq.s32.totalorder %s24, 0
      %p150 = por %p148, %p149
      %s151 = ssub.s32 %s18, %s25
      %p152 = scmp.eq.s32.totalorder %s151, 0
      %s154 = sadd.s32 %s153, 1
      %s155 = scalar_select %p152, %s153, %s154
      %p158 = pneg %p152
      %p159 = scmp.eq.s32.totalorder %s18, 1
      %p160 = por %p158, %p159
      %p161 = scmp.ne.s32.totalorder %s153, %s156
      %p162 = scmp.eq.s32.totalorder %s18, 0
      %p163 = por %p161, %p162
      %p164 = scmp.ne.s32.totalorder %s153, %s156
      %p165 = scmp.eq.s32.totalorder %s23, 1
      %p166 = por %p164, %p165
      %p167 = scmp.ne.s32.totalorder %s156, %s157
      %p168 = scmp.eq.s32.totalorder %s23, 0
      %p169 = por %p167, %p168
      %p170 = scmp.ne.s32.totalorder %s156, %s157
      %p171 = scmp.eq.s32.totalorder %s24, 1
      %p172 = por %p170, %p171
      %p174 = scmp.ne.s32.totalorder %s157, %s173
      %p175 = scmp.eq.s32.totalorder %s24, 0
      %p176 = por %p174, %p175
      %p177 = scmp.le.s32.totalorder 1, %s18
      %p178 = scmp.lt.s32.totalorder %s18, 3
      %p179 = pnand %p177, %p178
      %p180 = pneg %p179
      // Predicated region
      $region9: #{tpu_custom_call.1} parent=5 // pred_check
        _
      $region10: #{tpu_custom_call.1} parent=5 // pred_check_branch
        %182 = sbr.rel (%p179) target = $region12
      $region11: #{tpu_custom_call.1} parent=5 // pred_region
        %s183 = ssub.s32 %s18, 1
        // Predicated region
        $region13: #{tpu_custom_call.1} parent=11 // pred_check
          %p184 = pneg %p65
        $region14: #{tpu_custom_call.1} parent=11 // pred_check_branch
          %186 = sbr.rel (%p184) target = $region16
        $region15: #{tpu_custom_call.1} parent=11 // pred_region
          _
        $region16: #{tpu_custom_call.1} parent=11 // pred_fallthru
          _
      $region12: #{tpu_custom_call.1} parent=5 // pred_fallthru
        _
      %p187 = scmp.lt.s32.totalorder %s18, 2
      // Predicated region
      $region17: #{tpu_custom_call.1} parent=5 // pred_check
        %p188 = pneg %p187
      $region18: #{tpu_custom_call.1} parent=5 // pred_check_branch
        %190 = sbr.rel (%p188) target = $region20
      $region19: #{tpu_custom_call.1} parent=5 // pred_region
        // Predicated region
        $region21: #{tpu_custom_call.1} parent=19 // pred_check
          %p191 = pneg %p38
        $region22: #{tpu_custom_call.1} parent=19 // pred_check_branch
          %193 = sbr.rel (%p191) target = $region24
        $region23: #{tpu_custom_call.1} parent=19 // pred_region
          %p194 = scmp.lt.s32.totalorder %s18, 1
          %s195 = scalar_select %p194, %s18, 1
          %s196 = smul.addr %s195, 4
          %s197 = scalar_lea.vmem %s0, %s196
        $region24: #{tpu_custom_call.1} parent=19 // pred_fallthru
          _
        // Predicated region
        $region25: #{tpu_custom_call.1} parent=19 // pred_check
          %p198 = pneg %p85
        $region26: #{tpu_custom_call.1} parent=19 // pred_check_branch
          %200 = sbr.rel (%p198) target = $region28
        $region27: #{tpu_custom_call.1} parent=19 // pred_region
          %p201 = scmp.lt.s32.totalorder %s18, 1
          %s202 = scalar_select %p201, %s18, 1
          %s203 = scalar_lea.vmem %s2, %s202
        $region28: #{tpu_custom_call.1} parent=19 // pred_fallthru
          _
      $region20: #{tpu_custom_call.1} parent=5 // pred_fallthru
        _
      %p204 = scmp.le.s32.totalorder 1, %s18
      %p205 = scmp.lt.s32.totalorder %s18, 3
      %p206 = pnand %p204, %p205
      %p207 = pneg %p206
      // Predicated region
      $region29: #{tpu_custom_call.1} parent=5 // pred_check
        _
      $region30: #{tpu_custom_call.1} parent=5 // pred_check_branch
        %209 = sbr.rel (%p206) target = $region32
      $region31: #{tpu_custom_call.1} parent=5 // pred_region
        %s210 = ssub.s32 %s18, 1
        %p211 = scmp.lt.s32.totalorder %s23, 1
        %s212 = scalar_select %p211, %s23, 1
        %s213 = smul.addr %s212, 4
        %s214 = scalar_lea.vmem %s0, %s213
        %p215 = pneg %p44
        %p216 = pneg %p41
        %p217 = pneg %p65
        %p218 = pneg %p62
        %p219 = scmp.lt.s32.totalorder %s23, 1
        %s220 = scalar_select %p219, %s23, 1
        %s221 = scalar_lea.vmem %s2, %s220
        %p222 = pneg %p91
        %p223 = pneg %p88
        %p224 = pneg %p117
        %p225 = pneg %p114
        %s226 = sand.u32 %s104, 1
        %s227 = scalar_lea.sflag [#allocation3], %s226
        %s228 = sand.u32 %s104, 1
        %s229 = smul.addr %s228, 4
        %s230 = scalar_lea.vmem [#allocation2], %s229
        %p231 = pneg %p143
        %p232 = pneg %p140
        %s233 = sand.u32 %s130, 1
        %s234 = scalar_lea.sflag [#allocation5], %s233
        %s235 = sand.u32 %s130, 1
        %s236 = smul.addr %s235, 4
        %s237 = scalar_lea.vmem [#allocation4], %s236
        %p238 = pneg %p169
        %p239 = pneg %p166
        %p240 = scmp.lt.s32.totalorder %s23, 1
        %s241 = scalar_select %p240, %s23, 1
        %s242 = smul.addr %s241, 4
        %s243 = scalar_lea.vmem %s5, %s242
        %p244 = scmp.lt.s32.totalorder %s23, 1
        %s245 = scalar_select %p244, %s23, 1
        %s246 = smul.addr %s245, 4
        %s247 = scalar_lea.vmem %s0, %s246
        %p248 = scmp.lt.s32.totalorder %s23, 1
        %s249 = scalar_select %p248, %s23, 1
        %s250 = scalar_lea.vmem %s2, %s249
        %p251 = scmp.lt.s32.totalorder %s23, 1
        %s252 = scalar_select %p251, %s23, 1
        %s253 = smul.addr %s252, 4
        %s254 = scalar_lea.vmem %s5, %s253
        %v255 = vld [vmem:[%s247] sm:$0xf]
        %v256 = vld [vmem:[%s1] sm:$0xff]
        %v257 = vld [vmem:[%s1 + $0x8] sm:$0x3f]
        %v258 = vld [vmem:[%s250] sm:$0x1]
        %v259 = vrcp.pop %v256
        %v260 = vmul.f32 1.0, %v259
        %v261 = vrcp.pop %v257
        %v262 = vmul.f32 1.0, %v261
        %v264 = vrot.slane %v260, 3
        %v266 = vmul.f32 %v257, %v264
        %vm267 = vcmask 29701
        %v268 = vsel %vm267, %v266, 0.0
        %269 = vadd.xlane.f32.xlu0 %v268
        %v270 = vpop.xlane.xlu0 %269
        %v271 = vmul.f32 %v255, %v255
        %v272 = vmul.f32 %v271, %v255
        %v273 = vmul.f32 %v271, %v271
        %v275 = vrot.slane %v255, 1
        %v277 = vmul.f32 %v272, %v275
        %v278 = vmul.f32 %v256, %v277
        %v280 = vrot.slane %v256, 2
        %v282 = vsub.f32 %v255, %v280
        %v284 = vrot.slane %v282, 7
        %v286 = vmul.f32 %v278, %v284
        %v287 = vmul.f32 %v256, %v273
        %v288 = vrot.slane %v256, 4
        %v290 = vsub.f32 %v255, %v288
        %v292 = vrot.slane %v290, 5
        %v294 = vmul.f32 %v287, %v292
        %v295 = vrot.slane %v256, 6
        %v297 = vsub.f32 %v255, %v295
        %v299 = vrot.slane %v297, 3
        %v301 = vmul.f32 %v256, %v299
        %303 = vset.pattern.permute.xlu0 0
        %304 = vperm.xlu0 %303, %v258
        %v305 = vpop.permute.xlu0 %304
        %v307 = vlaneseq
        %v308 = vshrl.u32 %v307, 7
        %v309 = vsub.s32 0, %v308
        %v310 = vrot.slane %v305, %v309
        %v311 = vsub.f32 %v310, %v286
        %v313 = vrot.slane %v294, 2
        %v315 = vsub.f32 %v311, %v313
        %v317 = vrot.slane %v301, 4
        %v319 = vsub.f32 %v315, %v317
        %v321 = vrot.slane %v319, 1
        %v323 = vmul.f32 %v260, %v321
        %v325 = vrot.slane %v270, 5
        %v327 = vmul.f32 %v255, %v325
        %v328 = vrot.slane %v255, 3
        %v330 = vmul.f32 %v266, %v328
        %v331 = vsel %vm267, %v330, 0.0
        %332 = vadd.xlane.f32.xlu0 %v331
        %v333 = vpop.xlane.xlu0 %332
        %v335 = vrot.slane %v333, 5
        %v337 = vsub.f32 %v327, %v335
        %v338 = vadd.f32 %v323, %v337
        %v339 = vrot.slane %v255, 2
        %v341 = vsub.f32 %v256, %v339
        %v343 = vrot.slane %v262, 1
        %v345 = vmul.f32 %v341, %v343
        %v346 = vsub.f32 %v257, %v275
        %v347 = vmul.f32 %v346, %v343
        %v348 = vsub.f32 %v257, %v255
        %v349 = vmul.f32 %v348, %v343
        %v351 = vrot.slane %v345, 6
        %v354 = vrot.slane %v347, 7
        %vm356 = vcmask 1040384
        %v357 = vsel %vm356, %v338, %v351
        %vm358 = vcmask 1041408
        %v359 = vsel %vm358, %v357, %v354
        %vm360 = vcmask 1042432
        %v361 = vsel %vm360, %v359, %v349
        %vm362 = vcmask 27648
        %363 = vst.msk [vmem:[%s230] sm:$0xf] %vm362, %v361
        %v364 = vlaneseq
        %v365 = vshrl.u32 %v364, 7
        %v366 = vlaneseq
        %v367 = vand.u32 %v366, 127
        %v368 = vsub.f32 0.0, %v256
        %v369 = vmul.f32 %v256, %v275
        %v370 = vmul.f32 %v369, %v272
        %v372 = vrot.slane %v370, 4
        %v374 = vsub.f32 %v368, %v372
        %v376 = vrot.slane %v287, 6
        %v378 = vsub.f32 %v374, %v376
        %v380 = vrot.slane %v378, 5
        %v382 = vmul.f32 %v260, %v380
        %v383 = vadd.f32 %v382, %v325
        %v385 = vrot.slane %v266, 5
        %v387 = vsub.f32 %v383, %v385
        %vm388 = vcmp.eq.s32.totalorder %v365, %v367
        %v389 = vsub.f32 0.0, %v266
        %v390 = vlaneseq
        %v391 = vshrl.u32 %v390, 7
        %v392 = vsub.s32 0, %v391
        %v393 = vrot.slane %v387, %v392
        %v394 = vlaneseq
        %v395 = vshrl.u32 %v394, 7
        %v396 = vsub.s32 5, %v395
        %v397 = vrot.slane %v389, %v396
        %v398 = vsel %vm388, %v393, %v397
        %399 = vst.msk [vmem:[%s237] sm:$0xf] %vm362, %v398
        %v400 = vsub.f32 0.0, %v260
        %v401 = vmul.f32 %v256, 3.0
        %v402 = vmul.f32 %v401, %v275
        %v403 = vmul.f32 %v402, %v271
        %v404 = vmul.f32 %v403, %v284
        %v406 = vrot.slane %v404, 1
        %v408 = vmul.f32 %v400, %v406
        %v409 = vmul.f32 %v256, %v272
        %v410 = vmul.f32 %v409, %v284
        %v412 = vrot.slane %v410, 1
        %v414 = vmul.f32 %v400, %v412
        %v415 = vmul.f32 %v256, 4.0
        %v416 = vmul.f32 %v415, %v272
        %v417 = vmul.f32 %v416, %v292
        %v419 = vrot.slane %v417, 3
        %v421 = vmul.f32 %v400, %v419
        %v423 = vrot.slane %v414, 7
        %v426 = vrot.slane %v421, 6
        %v428 = vsel %vm356, %v408, %v423
        %v429 = vsel %vm358, %v428, %v426
        %vm430 = vcmask 26624
        %431 = vst.msk [vmem:[%s254] sm:$0x7] %vm430, %v429
        %s432 = sand.u32 %s104, 1
        %s433 = scalar_lea.sflag [#allocation3], %s432
        %s434 = sand.u32 %s104, 1
        %s435 = smul.addr %s434, 4
        %s436 = scalar_lea.vmem [#allocation2], %s435
        %s437 = sand.u32 %s130, 1
        %s438 = scalar_lea.sflag [#allocation5], %s437
        %s439 = sand.u32 %s130, 1
        %s440 = smul.addr %s439, 4
        %s441 = scalar_lea.vmem [#allocation4], %s440
        %p442 = scmp.lt.s32.totalorder %s23, 1
        %s443 = scalar_select %p442, %s23, 1
        %s444 = smul.addr %s443, 4
        %s445 = scalar_lea.vmem %s5, %s444
        // Predicated region
        $region33: #{tpu_custom_call.1} parent=31 // pred_check
          %p446 = pneg %p114
        $region34: #{tpu_custom_call.1} parent=31 // pred_check_branch
          %448 = sbr.rel (%p446) target = $region36
        $region35: #{tpu_custom_call.1} parent=31 // pred_region
          %s450 = ssub.s32 64, 64
          %451 = vsyncadd %s433, %s450
          %s452 = smul.addr %s23, 64
          %s453 = scalar_lea.hbm %s3, %s452
          %s455 = sshll.u32 %s436, 4
          %s456 = int_to_ptr.vmem [resolvable:$true] %s455
          %458 = dma.vmem_to_hbm [thread:$0]  %s456, 64, %s453, %s433
        $region36: #{tpu_custom_call.1} parent=31 // pred_fallthru
          _
        // Predicated region
        $region37: #{tpu_custom_call.1} parent=31 // pred_check
          %p459 = pneg %p140
        $region38: #{tpu_custom_call.1} parent=31 // pred_check_branch
          %461 = sbr.rel (%p459) target = $region40
        $region39: #{tpu_custom_call.1} parent=31 // pred_region
          %s463 = ssub.s32 64, 64
          %464 = vsyncadd %s438, %s463
          %s465 = smul.addr %s23, 64
          %s466 = scalar_lea.hbm %s4, %s465
          %s468 = sshll.u32 %s441, 4
          %s469 = int_to_ptr.vmem [resolvable:$true] %s468
          %471 = dma.vmem_to_hbm [thread:$0]  %s469, 64, %s466, %s438
        $region40: #{tpu_custom_call.1} parent=31 // pred_fallthru
          _
        // Predicated region
        $region41: #{tpu_custom_call.1} parent=31 // pred_check
          %p472 = pneg %p166
        $region42: #{tpu_custom_call.1} parent=31 // pred_check_branch
          %474 = sbr.rel (%p472) target = $region44
        $region43: #{tpu_custom_call.1} parent=31 // pred_region
          _
        $region44: #{tpu_custom_call.1} parent=31 // pred_fallthru
          _
      $region32: #{tpu_custom_call.1} parent=5 // pred_fallthru
        _
      %p475 = scmp.le.s32.totalorder 2, %s18
      // Predicated region
      $region45: #{tpu_custom_call.1} parent=5 // pred_check
        %p476 = pneg %p475
      $region46: #{tpu_custom_call.1} parent=5 // pred_check_branch
        %478 = sbr.rel (%p476) target = $region48
      $region47: #{tpu_custom_call.1} parent=5 // pred_region
        %s479 = ssub.s32 %s18, 2
        // Predicated region
        $region49: #{tpu_custom_call.1} parent=47 // pred_check
          %p480 = pneg %p120
        $region50: #{tpu_custom_call.1} parent=47 // pred_check_branch
          %482 = sbr.rel (%p480) target = $region52
        $region51: #{tpu_custom_call.1} parent=47 // pred_region
          %s483 = sand.u32 %s105, 1
          %s484 = scalar_lea.sflag [#allocation3], %s483
          %s485 = sand.u32 %s105, 1
          %s486 = smul.addr %s485, 4
          %s487 = scalar_lea.vmem [#allocation2], %s486
          %488 = dma.done %s484, 64
        $region52: #{tpu_custom_call.1} parent=47 // pred_fallthru
          _
        // Predicated region
        $region53: #{tpu_custom_call.1} parent=47 // pred_check
          %p489 = pneg %p146
        $region54: #{tpu_custom_call.1} parent=47 // pred_check_branch
          %491 = sbr.rel (%p489) target = $region56
        $region55: #{tpu_custom_call.1} parent=47 // pred_region
          %s492 = sand.u32 %s131, 1
          %s493 = scalar_lea.sflag [#allocation5], %s492
          %s494 = sand.u32 %s131, 1
          %s495 = smul.addr %s494, 4
          %s496 = scalar_lea.vmem [#allocation4], %s495
          %497 = dma.done %s493, 64
        $region56: #{tpu_custom_call.1} parent=47 // pred_fallthru
          _
        // Predicated region
        $region57: #{tpu_custom_call.1} parent=47 // pred_check
          %p498 = pneg %p172
        $region58: #{tpu_custom_call.1} parent=47 // pred_check_branch
          %500 = sbr.rel (%p498) target = $region60
        $region59: #{tpu_custom_call.1} parent=47 // pred_region
          %p501 = scmp.lt.s32.totalorder %s24, 1
          %s502 = scalar_select %p501, %s24, 1
          %s503 = smul.addr %s502, 4
          %s504 = scalar_lea.vmem %s5, %s503
        $region60: #{tpu_custom_call.1} parent=47 // pred_fallthru
          _
      $region48: #{tpu_custom_call.1} parent=5 // pred_fallthru
        _
    $region6: #{tpu_custom_call.1} parent=1 // loop_footer
      %s22 = sadd.s32 1, %s18
    $region7: #{tpu_custom_call.1} parent=1 // loop_footer_branch
      %17 = sbr.rel target = $region3
    $region8: #{tpu_custom_call.1} parent=1 // loop_exit
      _
    %505 = vsyncpa [#allocation3], 1
    %s506 = scalar_lea.sflag [#allocation3], 1
    %507 = vsyncpa %s506, 1
    %508 = vsyncpa [#allocation5], 1
    %s509 = scalar_lea.sflag [#allocation5], 1
    %510 = vsyncpa %s509, 1

</llo_original>
